<compile_context>
chip_gen: v7x
topology: tpu7x:2x2x1
jax: 0.10.0
libtpu: 0.0.40
codegen_flags: <defaults>
</compile_context>

<pallas_src>
import functools

import jax
import jax.numpy as jnp
from jax.experimental import pallas as pl
from jax.experimental.pallas import tpu as pltpu


def _round_up(v, m):
    return ((v + m - 1) // m) * m


def highway_kernel(x_ref, w_ref, b_ref, o_ref, *, k, kp):
    x = x_ref[...]                       # [TB, K]      f32 (residual path stays f32)
    w = w_ref[...]                       # [K, 2*Kp]    bf16 fused [Wh | 0 | Wt | 0]
    b = b_ref[...]                       # [1, 2*Kp]    f32  fused [bh | 0 | bt | 0]

    # Single fused MXU matmul: bf16 operands, f32 accumulate.
    z = jnp.dot(x.astype(jnp.bfloat16), w,
                preferred_element_type=jnp.float32) + b        # [TB, 2*Kp]

    # Both gate halves start at a 128-lane-aligned column (no XLU relayout).
    zh = z[:, :k]
    zt = z[:, kp:kp + k]

    h = jnp.maximum(zh, 0.0)             # relu     (VPU)
    t = jax.nn.sigmoid(zt)               # sigmoid  (EUP)

    # out = t*h + (1-t)*x  ==  x + t*(h - x)   (one fewer VALU multiply)
    o_ref[...] = x + t * (h - x)


def highway_forward(x, wh, bh, wt, bt):
    """x: [B, K]; wh/wt: [K, K] stored [in, out]; bh/bt: [1, K].

    Returns [B, 1, K] to match the PyTorch module's output (unsqueeze(1))."""
    B, K = x.shape
    Kp = _round_up(K, 128)               # per-gate lane-aligned column stride

    # Fused, lane-aligned weight/bias.  Weight cast to bf16 for the MXU.
    w = jnp.zeros((K, 2 * Kp), jnp.float32)
    w = w.at[:, :K].set(wh).at[:, Kp:Kp + K].set(wt)
    w = w.astype(jnp.bfloat16)
    b = jnp.zeros((1, 2 * Kp), jnp.float32)
    b = b.at[:, :K].set(bh).at[:, Kp:Kp + K].set(bt)

    # ---- adaptive batch tile ----------------------------------------------
    # Target ~2 MiB per f32 x tile, rounded to the 256-row MXU height.
    TB = (2 * 1024 * 1024) // (4 * K)
    TB = max(256, (TB // 256) * 256)
    TB = min(TB, 8192)
    if TB >= B:
        if B >= 512:
            # Keep >= 2 grid steps so v7x can shard batch across its 2 TCs.
            TB = _round_up(pl.cdiv(B, 2), 8)
        else:
            TB = B                       # single full-extent block (always legal)

    # ---- explicit VMEM budget ---------------------------------------------
    def vmem_est(tb):
        return (2 * tb * K * 4           # x double buffer
                + 2 * tb * K * 4         # out double buffer
                + 2 * K * 2 * Kp * 2     # bf16 fused weight (2 pipeline buffers)
                + 2 * 2 * Kp * 4         # f32 fused bias
                + tb * 2 * Kp * 4)       # in-kernel z intermediate

    VMEM_CAP = 48 * 1024 * 1024          # < 64 MiB physical on v7x; fine on v5e/v6e
    while vmem_est(TB) > VMEM_CAP and TB > 8:
        TB = max(8, ((TB // 2) // 8) * 8)
    vmem_limit = int(min(VMEM_CAP, max(2 * vmem_est(TB), 16 * 1024 * 1024)))

    grid = (pl.cdiv(B, TB),)             # ragged last block handled by Pallas

    out2d = pl.pallas_call(
        functools.partial(highway_kernel, k=K, kp=Kp),
        out_shape=jax.ShapeDtypeStruct((B, K), jnp.float32),
        grid=grid,
        in_specs=[
            pl.BlockSpec((TB, K), lambda i: (i, 0)),         # x: streamed batch tiles
            pl.BlockSpec((K, 2 * Kp), lambda i: (0, 0)),     # fused bf16 weight: resident
            pl.BlockSpec((1, 2 * Kp), lambda i: (0, 0)),     # fused f32 bias:    resident
        ],
        out_specs=pl.BlockSpec((TB, K), lambda i: (i, 0)),
        compiler_params=pltpu.CompilerParams(
            dimension_semantics=("parallel",),               # shard batch tiles across TCs
            vmem_limit_bytes=vmem_limit,
        ),
    )(x, w, b)

    # glue: re-insert the size-1 axis produced by x.unsqueeze(1) in PyTorch
    return out2d.reshape(B, 1, K)


if __name__ == "__main__":
    B, K = 8, 32  # Batch, Kernel_dim (kernel_sizes)

    key = jax.random.PRNGKey(0)
    kx, kwh, kbh, kwt = jax.random.split(key, 4)

    # deterministic synthetic parameters (shapes from nn.Linear(K, K))
    x = jax.random.normal(kx, (B, K), dtype=jnp.float32)
    wh = jax.random.normal(kwh, (K, K), dtype=jnp.float32) * 0.1   # h_gate weight ([in, out])
    bh = jax.random.normal(kbh, (1, K), dtype=jnp.float32) * 0.1   # h_gate bias
    wt = jax.random.normal(kwt, (K, K), dtype=jnp.float32) * 0.1   # t_gate weight ([in, out])
    bt = jnp.full((1, K), -2.0, dtype=jnp.float32)                 # t_gate bias per _init_bias

    out = highway_forward(x, wh, bh, wt, bt)
    jax.block_until_ready(out)

    # pure-JAX f32 reference; tolerance loosened for the bf16 matmul operands.
    h_ref = jnp.maximum(x @ wh + bh, 0.0)
    t_ref = jax.nn.sigmoid(x @ wt + bt)
    ref = (t_ref * h_ref + (1.0 - t_ref) * x).reshape(B, 1, K)
    assert out.shape == (B, 1, K)
    assert jnp.allclose(out, ref, atol=2e-2, rtol=2e-2), (
        float(jnp.max(jnp.abs(out - ref))))

    print("KERNEL_OK")
</pallas_src>

<mosaic_0001>
module attributes {stable_mosaic.version = 11 : i64} {
  func.func @highway_kernel(%arg0: i32, %arg1: memref<8x32xf32, #tpu.memory_space<vmem>>, %arg2: memref<32x256xbf16, #tpu.memory_space<vmem>>, %arg3: memref<1x256xf32, #tpu.memory_space<vmem>>, %arg4: memref<8x32xf32, #tpu.memory_space<vmem>>) attributes {dimension_semantics = [#tpu.dimension_semantics<parallel>], iteration_bounds = array<i64: 1>, scalar_prefetch = 0 : i64, scratch_operands = 0 : i64, tpu.core_type = #tpu.core_type<tc>, window_params = [{transform_indices = @transform_0, window_bounds = array<i64: 8, 32>}, {pipeline_mode = #tpu.pipeline_mode<synchronous>, transform_indices = @transform_1, window_bounds = array<i64: 32, 256>}, {pipeline_mode = #tpu.pipeline_mode<synchronous>, transform_indices = @transform_2, window_bounds = array<i64: 1, 256>}, {transform_indices = @transform_3, window_bounds = array<i64: 8, 32>}]} {
    %c0 = arith.constant 0 : index
    %c0_0 = arith.constant 0 : index
    %0 = vector.load %arg1[%c0, %c0_0] : memref<8x32xf32, #tpu.memory_space<vmem>>, vector<8x32xf32>
    %c0_1 = arith.constant 0 : index
    %c0_2 = arith.constant 0 : index
    %1 = vector.load %arg2[%c0_1, %c0_2] : memref<32x256xbf16, #tpu.memory_space<vmem>>, vector<32x256xbf16>
    %c0_3 = arith.constant 0 : index
    %c0_4 = arith.constant 0 : index
    %2 = vector.load %arg3[%c0_3, %c0_4] : memref<1x256xf32, #tpu.memory_space<vmem>>, vector<1x256xf32>
    %3 = arith.truncf %0 : vector<8x32xf32> to vector<8x32xbf16>
    %cst = arith.constant dense<0.000000e+00> : vector<8x256xf32>
    %4 = tpu.matmul %3, %1, %cst {dimension_numbers = #tpu.dot_dimension_numbers<[1], [0], [0], [1], [0, 0, 1, 1], [], []>} : vector<8x32xbf16>, vector<32x256xbf16>, vector<8x256xf32> -> vector<8x256xf32>
    %5 = vector.broadcast %2 : vector<1x256xf32> to vector<8x256xf32>
    %6 = arith.addf %4, %5 : vector<8x256xf32>
    %7 = vector.extract_strided_slice %6 {offsets = [0, 0], sizes = [8, 32], strides = [1, 1]} : vector<8x256xf32> to vector<8x32xf32>
    %8 = vector.extract_strided_slice %6 {offsets = [0, 128], sizes = [8, 32], strides = [1, 1]} : vector<8x256xf32> to vector<8x32xf32>
    %cst_5 = arith.constant 0.000000e+00 : f32
    %9 = vector.broadcast %cst_5 : f32 to vector<8x32xf32>
    %10 = arith.maximumf %7, %9 : vector<8x32xf32>
    %11 = arith.negf %8 : vector<8x32xf32>
    %12 = math.exp %11 : vector<8x32xf32>
    %cst_6 = arith.constant 1.000000e+00 : f32
    %13 = vector.broadcast %cst_6 : f32 to vector<8x32xf32>
    %14 = arith.addf %13, %12 : vector<8x32xf32>
    %15 = arith.divf %13, %14 : vector<8x32xf32>
    %16 = arith.subf %10, %0 : vector<8x32xf32>
    %17 = arith.mulf %15, %16 : vector<8x32xf32>
    %18 = arith.addf %0, %17 : vector<8x32xf32>
    %c0_7 = arith.constant 0 : index
    %c0_8 = arith.constant 0 : index
    %19 = vector.load %arg4[%c0_7, %c0_8] : memref<8x32xf32, #tpu.memory_space<vmem>>, vector<8x32xf32>
    tpu.vector_store %arg4[%c0_7, %c0_8], %18 {strides = array<i32>} : memref<8x32xf32, #tpu.memory_space<vmem>>, vector<8x32xf32>,
    return
  }
  func.func @transform_0(%arg0: i32) -> (i32, i32) {
    %c0_i32 = arith.constant 0 : i32
    %c0_i32_0 = arith.constant 0 : i32
    return %arg0, %c0_i32 : i32, i32
  }
  func.func @transform_1(%arg0: i32) -> (i32, i32) {
    %c0_i32 = arith.constant 0 : i32
    %c0_i32_0 = arith.constant 0 : i32
    %c0_i32_1 = arith.constant 0 : i32
    return %c0_i32, %c0_i32_0 : i32, i32
  }
  func.func @transform_2(%arg0: i32) -> (i32, i32) {
    %c0_i32 = arith.constant 0 : i32
    %c0_i32_0 = arith.constant 0 : i32
    %c0_i32_1 = arith.constant 0 : i32
    return %c0_i32, %c0_i32_0 : i32, i32
  }
  func.func @transform_3(%arg0: i32) -> (i32, i32) {
    %c0_i32 = arith.constant 0 : i32
    %c0_i32_0 = arith.constant 0 : i32
    return %arg0, %c0_i32 : i32, i32
  }
}

</mosaic_0001>

<llo_original>
// kernel: tpu_custom_call.1
$region0: #{tpu_custom_call.1}
  #allocation0 [shape = 'u32[]', space=smem, size = 0x4, offset = 0x4, fixed_abs, tag = 'smem constant byte address 0x4 - core index']
  #allocation1 [shape = 'u32[144,128]{1,0:T(1,128)}', space=vmem, size = 0x12000, scoped, tag = 'internal scratch']
  %s0 = inlined_call_operand.hbm [shape: f32[8,32], index: 0, kind: input, shape index: {}]
  %s1 = inlined_call_operand.hbm [shape: bf16[32,256], index: 1, kind: input, shape index: {}]
  %s2 = inlined_call_operand.vmem [shape: f32[1,256], index: 2, kind: input, shape index: {}]
  %s3 = inlined_call_operand.hbm [shape: f32[8,32], index: 3, kind: output, shape index: {}]
  %s4 = sld [smem:[#allocation0]]
  $region30: #{tpu_custom_call.1} parent=0
    _
  %s6 = ssub.s32 1, %s4
  %s7 = scalar_select 0, %s6, %s4
  $region1: #{tpu_custom_call.1} parent=0
    #allocation2 [shape = 'u8[4096]{0}', space=vmem, size = 0x1000, scoped, tag = 'input window, operand 0, single buffered']
    #allocation3 [shape = 's32[1]{0}', space=sflag, size = 0x4, scoped, tag = 'scoped memory for tpu_custom_call.1']
    #allocation4 [shape = 's32[1]{0}', space=sflag, size = 0x4, scoped, tag = 'scoped memory for tpu_custom_call.1']
    #allocation5 [shape = 'u8[16384]{0}', space=vmem, size = 0x4000, scoped, tag = 'input window, operand 1, single buffered']
    #allocation6 [shape = 's32[1]{0}', space=sflag, size = 0x4, scoped, tag = 'scoped memory for tpu_custom_call.1']
    #allocation7 [shape = 'u8[4096]{0}', space=vmem, size = 0x1000, scoped, tag = 'output window, operand 0, single buffered']
    %8 = vsyncpa [#allocation3], 0
    %9 = vsyncpa [#allocation6], 0
    %10 = vsyncpa [#allocation4], 0
    // Predicated region
    $region2: #{tpu_custom_call.1} parent=1 // pred_check
      _
    $region3: #{tpu_custom_call.1} parent=1 // pred_check_branch
      %12 = sbr.rel (0) target = $region5
    $region4: #{tpu_custom_call.1} parent=1 // pred_region
      %s14 = ssub.s32 128, 128
      %15 = vsyncadd [#allocation3], %s14
      %s17 = sshll.u32 [#allocation2], 4
      %s18 = int_to_ptr.vmem [resolvable:$true] %s17
      %20 = dma.hbm_to_vmem [thread:$0]  %s0, 128, %s18, [#allocation3]
    $region5: #{tpu_custom_call.1} parent=1 // pred_fallthru
      _
    // Predicated region
    $region6: #{tpu_custom_call.1} parent=1 // pred_check
      _
    $region7: #{tpu_custom_call.1} parent=1 // pred_check_branch
      %22 = sbr.rel (0) target = $region9
    $region8: #{tpu_custom_call.1} parent=1 // pred_region
      %s24 = ssub.s32 512, 512
      %25 = vsyncadd [#allocation6], %s24
      %s26 = sshll.u32 [#allocation5], 4
      %s27 = int_to_ptr.vmem [resolvable:$true] %s26
      %32 = dma.hbm_to_vmem [thread:$0]  %s1, 512, %s27, [#allocation6], 128, 128, 8
    $region9: #{tpu_custom_call.1} parent=1 // pred_fallthru
      _
    // Predicated region
    $region10: #{tpu_custom_call.1} parent=1 // pred_check
      _
    $region11: #{tpu_custom_call.1} parent=1 // pred_check_branch
      %34 = sbr.rel (0) target = $region13
    $region12: #{tpu_custom_call.1} parent=1 // pred_region
      _
    $region13: #{tpu_custom_call.1} parent=1 // pred_fallthru
      _
    // Predicated region
    $region14: #{tpu_custom_call.1} parent=1 // pred_check
      _
    $region15: #{tpu_custom_call.1} parent=1 // pred_check_branch
      %36 = sbr.rel (0) target = $region17
    $region16: #{tpu_custom_call.1} parent=1 // pred_region
      %37 = dma.done [#allocation3], 128
    $region17: #{tpu_custom_call.1} parent=1 // pred_fallthru
      _
    // Predicated region
    $region18: #{tpu_custom_call.1} parent=1 // pred_check
      _
    $region19: #{tpu_custom_call.1} parent=1 // pred_check_branch
      %39 = sbr.rel (0) target = $region21
    $region20: #{tpu_custom_call.1} parent=1 // pred_region
      %40 = dma.done [#allocation6], 512
    $region21: #{tpu_custom_call.1} parent=1 // pred_fallthru
      _
    %v42 = vld [vmem:[#allocation2] sm:$0xff]
    %v43 = vld [vmem:[#allocation5] sm:$0xff]
    %v44 = vld [vmem:[#allocation5 + $0x8] sm:$0xff]
    %v45 = vld [vmem:[#allocation5 + $0x10] sm:$0xff]
    %v46 = vld [vmem:[#allocation5 + $0x18] sm:$0xff]
    %v47 = vld [vmem:[%s2] sm:$0x3]
    %v48 = vpack.c.bf16 %v42, %v42
    %v50 = vlaneseq
    %v51 = vshrl.u32 %v50, 7
    %v52 = vsub.s32 0, %v51
    %v53 = vrot.slane %v47, %v52
    %v54 = vlaneseq
    %v55 = vshrl.u32 %v54, 7
    %v56 = vsub.s32 1, %v55
    %v57 = vrot.slane %v47, %v56
    %v64 = vunpack.c.l.b16 %v43
    %v65 = vunpack.c.h.b16 %v43
    %v66 = vunpack.c.l.b16 %v44
    %v67 = vunpack.c.h.b16 %v44
    %v68 = vunpack.c.l.b16 %v45
    %v69 = vunpack.c.h.b16 %v45
    %v70 = vunpack.c.l.b16 %v46
    %v71 = vunpack.c.h.b16 %v46
    %v72 = vpack.c.b16 %v66, %v64
    %v73 = vpack.c.b16 %v67, %v65
    %v74 = vpack.c.b16 %v70, %v68
    %v75 = vpack.c.b16 %v71, %v69
    %vm80 = vcmask 261120
    %v82 = vsel %vm80, %v48, 0
    %84 = vmatprep.subr.bf16.mxu0 %v73
    %85 = vmatpush1.bf16.msra.mxu0 %v72
    %86 = vmatprep.subr.bf16.mxu0 %v75
    %87 = vmatpush1.bf16.msra.mxu0 %v74
    %88 = vmatprep.subr.bf16.mxu0 0
    %89 = vmatpush1.bf16.msra.mxu0 0
    %90 = vmatprep.subr.bf16.mxu0 0
    %91 = vmatpush1.bf16.msra.mxu0 0
    %92 = vmatprep.subr.bf16.mxu0 0
    %93 = vmatpush1.bf16.msra.mxu0 0
    %94 = vmatprep.subr.bf16.mxu0 0
    %95 = vmatpush1.bf16.msra.mxu0 0
    %96 = vmatprep.subr.bf16.mxu0 0
    %97 = vmatpush1.bf16.msra.mxu0 0
    %98 = vmatprep.subr.bf16.mxu0 0
    %99 = vmatpush1.bf16.msra.mxu0 0
    %100 = vmatprep.subr.bf16.mxu0 0
    %101 = vmatpush1.bf16.msra.mxu0 0
    %102 = vmatprep.subr.bf16.mxu0 0
    %103 = vmatpush1.bf16.msra.mxu0 0
    %104 = vmatprep.subr.bf16.mxu0 0
    %105 = vmatpush1.bf16.msra.mxu0 0
    %106 = vmatprep.subr.bf16.mxu0 0
    %107 = vmatpush1.bf16.msra.mxu0 0
    %108 = vmatprep.subr.bf16.mxu0 0
    %109 = vmatpush1.bf16.msra.mxu0 0
    %110 = vmatprep.subr.bf16.mxu0 0
    %111 = vmatpush1.bf16.msra.mxu0 0
    %112 = vmatprep.subr.bf16.mxu0 0
    %113 = vmatpush1.bf16.msra.mxu0 0
    %114 = vmatprep.subr.bf16.mxu0 0
    %115 = vmatpush1.bf16.msra.mxu0 0
    %116 = vmatprep.mubr.bf16.mxu0 0
    %117 = vmatmul.mubr.bf16.gmra.mrb[0].mxu0 %v82
    %v118 = vpop.f32.mrb[0].mxu0
    %v119 = vadd.f32 %v53, %v118
    %v120 = vpop.f32.mrb[0].mxu0
    %v121 = vadd.f32 %v57, %v120
    %v122 = vpop.f32.mrb[0].mxu0
    %v123 = vpop.f32.mrb[0].mxu0
    %124 = vdwg.mxu0
    %v125 = vmax.f32 %v119, 0.0
    %v126 = vxor.u32 %v121, 2147483648
    %v127 = vmul.f32 %v126, 1.442695
    %v128 = vpow.pop %v127
    %v129 = vadd.f32 %v128, 1.0
    %v130 = vrcp.pop %v129
    %v131 = vmul.f32 1.0, %v130
    %v132 = vsub.f32 %v125, %v42
    %v133 = vmul.f32 %v131, %v132
    %v134 = vadd.f32 %v42, %v133
    %135 = vst.msk [vmem:[#allocation7] sm:$0xff] %vm80, %v134
    // Predicated region
    $region22: #{tpu_custom_call.1} parent=1 // pred_check
      _
    $region23: #{tpu_custom_call.1} parent=1 // pred_check_branch
      %137 = sbr.rel (0) target = $region25
    $region24: #{tpu_custom_call.1} parent=1 // pred_region
      %s139 = ssub.s32 128, 128
      %140 = vsyncadd [#allocation4], %s139
      %s142 = sshll.u32 [#allocation7], 4
      %s143 = int_to_ptr.vmem [resolvable:$true] %s142
      %145 = dma.vmem_to_hbm [thread:$0]  %s143, 128, %s3, [#allocation4]
    $region25: #{tpu_custom_call.1} parent=1 // pred_fallthru
      _
    // Predicated region
    $region26: #{tpu_custom_call.1} parent=1 // pred_check
      _
    $region27: #{tpu_custom_call.1} parent=1 // pred_check_branch
      %147 = sbr.rel (0) target = $region29
    $region28: #{tpu_custom_call.1} parent=1 // pred_region
      %148 = dma.done [#allocation4], 128
    $region29: #{tpu_custom_call.1} parent=1 // pred_fallthru
      _
    %149 = vsyncpa [#allocation3], 1
    %150 = vsyncpa [#allocation6], 1
    %151 = vsyncpa [#allocation4], 1

</llo_original>
